<compile_context>
chip_gen: v6e
topology: v6e:2x2x1
jax: 0.10.0
libtpu: 0.0.40
codegen_flags: <defaults>
</compile_context>

<pallas_src>
import functools

import jax
import jax.numpy as jnp
from jax import lax
from jax.experimental import pallas as pl
from jax.experimental.pallas import tpu as pltpu


# ---------------------------------------------------------------------------
# Single-pass kernel: full-R blocks, tiled over (batch, columns).
# ---------------------------------------------------------------------------
def _normalization_kernel(x_ref, o_ref):
    r = x_ref.shape[1]
    denom = jnp.float32(r - 1)  # unbiased (ddof=1); r == 1 -> NaN like torch.std
    x = x_ref[...].astype(jnp.float32)                      # (TB, R, TC)
    mean = jnp.mean(x, axis=1, keepdims=True)               # (TB, 1, TC)
    if o_ref.dtype == jnp.float32:
        # Stage the centered block through the output buffer: no extra
        # block-sized scratch on top of the pipelined in/out buffers.
        o_ref[...] = x - mean
        diff = o_ref[...]
        var = jnp.sum(diff * diff, axis=1, keepdims=True) / denom
        o_ref[...] = diff * lax.rsqrt(var)                  # rsqrt on the EUP
    else:
        diff = x - mean
        var = jnp.sum(diff * diff, axis=1, keepdims=True) / denom
        o_ref[...] = (diff * lax.rsqrt(var)).astype(o_ref.dtype)


# ---------------------------------------------------------------------------
# Two-pass (large-R) fallback: R-tiled stats accumulation + normalize pass.
# ---------------------------------------------------------------------------
def _stats_kernel(x_ref, sum_ref, sq_ref, *, total_rows):
    ri = pl.program_id(2)

    @pl.when(ri == 0)
    def _():
        sum_ref[...] = jnp.zeros_like(sum_ref)
        sq_ref[...] = jnp.zeros_like(sq_ref)

    x = x_ref[...].astype(jnp.float32)                      # (1, TR, TC)
    tr = x.shape[1]
    row = ri * tr + lax.broadcasted_iota(jnp.int32, x.shape, 1)
    x = jnp.where(row < total_rows, x, 0.0)                 # mask ragged R edge
    sum_ref[...] += jnp.sum(x, axis=1, keepdims=True)
    sq_ref[...] += jnp.sum(x * x, axis=1, keepdims=True)


def _apply_kernel(x_ref, mean_ref, inv_ref, o_ref):
    x = x_ref[...].astype(jnp.float32)
    o_ref[...] = ((x - mean_ref[...]) * inv_ref[...]).astype(o_ref.dtype)


# ---------------------------------------------------------------------------
# Tile / budget selection.
# ---------------------------------------------------------------------------
def _vmem_budget():
    """(per-block byte budget, vmem_limit_bytes), keyed off the chip generation."""
    cap = None
    try:
        cap = getattr(pltpu.get_tpu_info(), "vmem_capacity_bytes", None)
    except Exception:
        cap = None
    if cap is not None and cap > 96 * 1024 * 1024:
        # 128-MiB-VMEM parts (v5e / v6e): bigger blocks, fewer grid steps.
        return 12 * 1024 * 1024, 96 * 1024 * 1024
    # 64-MiB-per-TensorCore parts (v7x class) or unknown: stay conservative.
    # ~4 MiB blocks already sit at ~85% of the HBM roofline.
    return 4 * 1024 * 1024, 40 * 1024 * 1024


def _choose_tiles(B, R, C, itemsize, target_buf_bytes):
    """Pick (TB, TC) for the full-R path.

    TC is a multiple of 128 (lane-dense stores); ragged B / C edges are handled
    by pl.cdiv grids + Pallas boundary masking instead of shrinking tiles to an
    exact divisor. Footprint math uses the sublane-rounded row count.
    """
    r_pad = ((R + 7) // 8) * 8
    c_tiles = pl.cdiv(C, 128)
    col_cap = max(1, target_buf_bytes // (r_pad * 128 * itemsize))
    tc = 128 * min(c_tiles, col_cap)
    slice_bytes = r_pad * tc * itemsize
    tb = max(1, min(B, target_buf_bytes // slice_bytes))
    # Give v7x's two TensorCores at least two parallel grid steps when possible.
    if pl.cdiv(B, tb) * pl.cdiv(C, tc) < 2:
        if tb > 1:
            tb = (tb + 1) // 2
        elif tc > 128:
            tc = 128 * ((tc // 128 + 1) // 2)
    return tb, tc


def _choose_two_pass_tiles(R, C, itemsize, target_buf_bytes):
    r_pad = ((R + 7) // 8) * 8
    c_tiles = pl.cdiv(C, 128)
    tr = max(8, (target_buf_bytes // (128 * itemsize)) // 8 * 8)
    tr = min(tr, r_pad)
    col_cap = max(1, target_buf_bytes // (tr * 128 * itemsize))
    tc = 128 * min(c_tiles, col_cap)
    return tr, tc


# ---------------------------------------------------------------------------
# Wrappers.
# ---------------------------------------------------------------------------
def _normalization_two_pass(x, tr, tc, vmem_limit):
    B, R, C = x.shape
    grid_r = pl.cdiv(R, tr)
    grid_c = pl.cdiv(C, tc)

    stats_shape = jax.ShapeDtypeStruct((B, 1, C), jnp.float32)
    s, sq = pl.pallas_call(
        functools.partial(_stats_kernel, total_rows=R),
        out_shape=(stats_shape, stats_shape),
        grid_spec=pltpu.PrefetchScalarGridSpec(
            num_scalar_prefetch=0,
            grid=(B, grid_c, grid_r),
            in_specs=[pl.BlockSpec((1, tr, tc), lambda b, c, r: (b, r, c))],
            out_specs=[pl.BlockSpec((1, 1, tc), lambda b, c, r: (b, 0, c)),
                       pl.BlockSpec((1, 1, tc), lambda b, c, r: (b, 0, c))],
        ),
        compiler_params=pltpu.CompilerParams(
            dimension_semantics=("parallel", "parallel", "arbitrary"),
            vmem_limit_bytes=vmem_limit,
        ),
    )(x)

    mean = s / jnp.float32(R)
    # E[x^2] - mean^2 form (mildly cancellation-prone when |mean| >> std);
    # unbiased denominator, R == 1 -> NaN like torch.std.
    var = (sq - jnp.float32(R) * mean * mean) / jnp.float32(R - 1)
    inv_std = lax.rsqrt(var)

    return pl.pallas_call(
        _apply_kernel,
        out_shape=jax.ShapeDtypeStruct((B, R, C), x.dtype),
        grid_spec=pltpu.PrefetchScalarGridSpec(
            num_scalar_prefetch=0,
            grid=(B, grid_r, grid_c),
            in_specs=[pl.BlockSpec((1, tr, tc), lambda b, r, c: (b, r, c)),
                      pl.BlockSpec((1, 1, tc), lambda b, r, c: (b, 0, c)),
                      pl.BlockSpec((1, 1, tc), lambda b, r, c: (b, 0, c))],
            out_specs=pl.BlockSpec((1, tr, tc), lambda b, r, c: (b, r, c)),
        ),
        compiler_params=pltpu.CompilerParams(
            dimension_semantics=("parallel", "parallel", "parallel"),
            vmem_limit_bytes=vmem_limit,
        ),
    )(x, mean, inv_std)


def normalization(x, *, force_two_pass=False):
    """Per-cross-section column normalization, matching the PyTorch module."""
    assert x.ndim == 3, "expected (batch, rows, columns)"
    B, R, C = x.shape
    itemsize = jnp.dtype(x.dtype).itemsize
    target_buf, vmem_limit = _vmem_budget()
    r_pad = ((R + 7) // 8) * 8

    # Large-R fallback: a single full-R (rows, 128) slice would blow the block
    # budget, so accumulate stats over R tiles and normalize in a second pass.
    if force_two_pass or r_pad * 128 * itemsize > target_buf:
        tr, tc = _choose_two_pass_tiles(R, C, itemsize, target_buf)
        return _normalization_two_pass(x, tr, tc, vmem_limit)

    TB, TC = _choose_tiles(B, R, C, itemsize, target_buf)
    grid = (pl.cdiv(B, TB), pl.cdiv(C, TC))

    return pl.pallas_call(
        _normalization_kernel,
        out_shape=jax.ShapeDtypeStruct((B, R, C), x.dtype),
        grid_spec=pltpu.PrefetchScalarGridSpec(
            num_scalar_prefetch=0,
            grid=grid,
            in_specs=[pl.BlockSpec((TB, R, TC), lambda b, c: (b, 0, c))],
            out_specs=pl.BlockSpec((TB, R, TC), lambda b, c: (b, 0, c)),
        ),
        compiler_params=pltpu.CompilerParams(
            # Stats are independent across both batch and columns.
            dimension_semantics=("parallel", "parallel"),
            vmem_limit_bytes=vmem_limit,
        ),
        cost_estimate=pl.CostEstimate(
            flops=5 * B * R * C,
            transcendentals=B * C,
            bytes_accessed=2 * B * R * C * itemsize,
        ),
    )(x)


def _normalization_ref(x):
    # Pure-JAX reference mirroring the PyTorch loop (unbiased std).
    x = x.astype(jnp.float32)
    mean = jnp.mean(x, axis=1, keepdims=True)
    var = jnp.sum((x - mean) ** 2, axis=1, keepdims=True) / (x.shape[1] - 1)
    return (x - mean) / jnp.sqrt(var)


if __name__ == "__main__":
    key = jax.random.PRNGKey(0)
    k1, k2, k3 = jax.random.split(key, 3)

    # 1) Small cross-sections (C < 128): masked lanes, no wrapper pad/copy.
    x1 = jax.random.normal(k1, (2, 16, 32), dtype=jnp.float32) * 3.0 + 1.5
    out1 = jax.block_until_ready(normalization(x1))
    ref1 = _normalization_ref(x1)
    assert out1.shape == x1.shape and out1.dtype == jnp.float32
    assert jnp.allclose(out1, ref1, atol=1e-5, rtol=1e-5), "mismatch (small)"

    # 2) Ragged batch and column tiles (B=3, C=200): cdiv grid + boundary masks.
    x2 = jax.random.normal(k2, (3, 24, 200), dtype=jnp.float32) * 0.7 - 2.0
    out2 = jax.block_until_ready(normalization(x2))
    ref2 = _normalization_ref(x2)
    assert jnp.allclose(out2, ref2, atol=1e-5, rtol=1e-5), "mismatch (ragged)"

    # 3) Native-dtype passthrough: bf16 in -> bf16 out (f32 math on-chip).
    x3 = x2.astype(jnp.bfloat16)
    out3 = jax.block_until_ready(normalization(x3))
    assert out3.dtype == jnp.bfloat16
    assert jnp.allclose(out3.astype(jnp.float32), _normalization_ref(x3),
                        atol=5e-2, rtol=5e-2), "mismatch (bf16)"

    # 4) Two-pass (R-tiled) fallback path, forced at a small shape.
    x4 = jax.random.normal(k3, (2, 20, 200), dtype=jnp.float32) * 2.0 + 0.5
    out4 = jax.block_until_ready(normalization(x4, force_two_pass=True))
    ref4 = _normalization_ref(x4)
    assert jnp.allclose(out4, ref4, atol=1e-4, rtol=1e-4), "mismatch (two-pass)"

    print("KERNEL_OK")
</pallas_src>

<mosaic_0001>
module attributes {stable_mosaic.version = 11 : i64} {
  func.func @_normalization_kernel(%arg0: i32, %arg1: i32, %arg2: memref<1x16x128xf32, #tpu.memory_space<vmem>>, %arg3: memref<1x16x128xf32, #tpu.memory_space<vmem>>) attributes {dimension_semantics = [#tpu.dimension_semantics<parallel>, #tpu.dimension_semantics<parallel>], iteration_bounds = array<i64: 2, 1>, scalar_prefetch = 0 : i64, scratch_operands = 0 : i64, tpu.core_type = #tpu.core_type<tc>, window_params = [{transform_indices = @transform_0, window_bounds = array<i64: 1, 16, 128>}, {transform_indices = @transform_1, window_bounds = array<i64: 1, 16, 128>}]} {
    %c0 = arith.constant 0 : index
    %c0_0 = arith.constant 0 : index
    %c0_1 = arith.constant 0 : index
    %0 = vector.load %arg2[%c0, %c0_0, %c0_1] : memref<1x16x128xf32, #tpu.memory_space<vmem>>, vector<1x16x128xf32>
    %cst = arith.constant dense<0.000000e+00> : vector<1x128xf32>
    %1 = vector.multi_reduction <add>, %0, %cst [1] : vector<1x16x128xf32> to vector<1x128xf32>
    %2 = vector.shape_cast %1 : vector<1x128xf32> to vector<1x1x128xf32>
    %cst_2 = arith.constant 1.600000e+01 : f32
    %3 = vector.broadcast %cst_2 : f32 to vector<1x1x128xf32>
    %4 = arith.divf %2, %3 : vector<1x1x128xf32>
    %5 = vector.broadcast %4 : vector<1x1x128xf32> to vector<1x16x128xf32>
    %6 = arith.subf %0, %5 : vector<1x16x128xf32>
    %c0_3 = arith.constant 0 : index
    %c0_4 = arith.constant 0 : index
    %c0_5 = arith.constant 0 : index
    %7 = vector.load %arg3[%c0_3, %c0_4, %c0_5] : memref<1x16x128xf32, #tpu.memory_space<vmem>>, vector<1x16x128xf32>
    tpu.vector_store %arg3[%c0_3, %c0_4, %c0_5], %6 {strides = array<i32>} : memref<1x16x128xf32, #tpu.memory_space<vmem>>, vector<1x16x128xf32>,
    %c0_6 = arith.constant 0 : index
    %c0_7 = arith.constant 0 : index
    %c0_8 = arith.constant 0 : index
    %8 = vector.load %arg3[%c0_6, %c0_7, %c0_8] : memref<1x16x128xf32, #tpu.memory_space<vmem>>, vector<1x16x128xf32>
    %9 = arith.mulf %8, %8 : vector<1x16x128xf32>
    %cst_9 = arith.constant dense<0.000000e+00> : vector<1x128xf32>
    %10 = vector.multi_reduction <add>, %9, %cst_9 [1] : vector<1x16x128xf32> to vector<1x128xf32>
    %11 = vector.shape_cast %10 : vector<1x128xf32> to vector<1x1x128xf32>
    %cst_10 = arith.constant 1.500000e+01 : f32
    %12 = vector.broadcast %cst_10 : f32 to vector<1x1x128xf32>
    %13 = arith.divf %11, %12 : vector<1x1x128xf32>
    %14 = math.rsqrt %13 : vector<1x1x128xf32>
    %15 = vector.broadcast %14 : vector<1x1x128xf32> to vector<1x16x128xf32>
    %16 = arith.mulf %8, %15 : vector<1x16x128xf32>
    %c0_11 = arith.constant 0 : index
    %c0_12 = arith.constant 0 : index
    %c0_13 = arith.constant 0 : index
    %17 = vector.load %arg3[%c0_11, %c0_12, %c0_13] : memref<1x16x128xf32, #tpu.memory_space<vmem>>, vector<1x16x128xf32>
    tpu.vector_store %arg3[%c0_11, %c0_12, %c0_13], %16 {strides = array<i32>} : memref<1x16x128xf32, #tpu.memory_space<vmem>>, vector<1x16x128xf32>,
    return
  }
  func.func @transform_0(%arg0: i32, %arg1: i32) -> (i32, i32, i32) {
    %c0_i32 = arith.constant 0 : i32
    %c0_i32_0 = arith.constant 0 : i32
    return %arg0, %c0_i32, %arg1 : i32, i32, i32
  }
  func.func @transform_1(%arg0: i32, %arg1: i32) -> (i32, i32, i32) {
    %c0_i32 = arith.constant 0 : i32
    %c0_i32_0 = arith.constant 0 : i32
    return %arg0, %c0_i32, %arg1 : i32, i32, i32
  }
}

</mosaic_0001>

<llo_original>
// kernel: tpu_custom_call.1
$region0: #{tpu_custom_call.1}
  #allocation0 [shape = 'u32[]', space=smem, size = 0x4, offset = 0x4, fixed_abs, tag = 'smem constant byte address 0x4 - core index']
  #allocation1 [shape = 'u32[144,128]{1,0:T(1,128)}', space=vmem, size = 0x12000, scoped, tag = 'internal scratch']
  %s0 = inlined_call_operand.hbm [shape: f32[2,16,32], index: 0, kind: input, shape index: {}]
  %s1 = inlined_call_operand.hbm [shape: f32[2,16,32], index: 1, kind: output, shape index: {}]
  %s2 = sld [smem:[#allocation0]]
  $region41: #{tpu_custom_call.1} parent=0
    _
  %s4 = ssub.s32 1, %s2
  %s5 = scalar_select 0, %s4, %s2
  $region1: #{tpu_custom_call.1} parent=0
    #allocation2 [shape = 'u8[16384]{0}', space=vmem, size = 0x4000, scoped, tag = 'input window, operand 0']
    #allocation3 [shape = 's32[2]{0}', space=sflag, size = 0x8, scoped, tag = 'scoped memory for tpu_custom_call.1']
    #allocation4 [shape = 's32[2]{0}', space=sflag, size = 0x8, scoped, tag = 'scoped memory for tpu_custom_call.1']
    #allocation5 [shape = 'u8[16384]{0}', space=vmem, size = 0x4000, scoped, tag = 'output window, operand 0']
    %6 = vsyncpa [#allocation3], 0
    %s7 = scalar_lea.sflag [#allocation3], 1
    %8 = vsyncpa %s7, 0
    %9 = vsyncpa [#allocation4], 0
    %s10 = scalar_lea.sflag [#allocation4], 1
    %11 = vsyncpa %s10, 0
    loop: start=0, step=1, limit=4
    $region2: #{tpu_custom_call.1} parent=1 // loop_pre_header
      _
    $region3: #{tpu_custom_call.1} parent=1 // loop_header
      %s13 = sphi 0, %s17
      %p14 = scmp.ge.s32.totalorder %s13, 4
      %s20 = sphi 0, %s32
      %s21 = sphi 0, %s28
      %s22 = sphi 0, %s20
      %s23 = sphi 0, %s21
      %s24 = sphi 0, %s22
      %s25 = sphi 0, %s23
      %s37 = sphi 0, %s39
      %s40 = sphi 0, %s37
      %s41 = sphi 0, %s40
      %s57 = sphi 0, %s41
      %s65 = sphi 0, %s67
      %s68 = sphi 0, %s65
      %s69 = sphi 0, %s68
      %s85 = sphi 0, %s69
    $region4: #{tpu_custom_call.1} parent=1 // loop_header_branch
      %16 = sbr.rel (%p14) target = $region8
    $region5: #{tpu_custom_call.1} parent=1 // loop_body
      %s18 = ssub.s32 %s13, 1
      %s19 = ssub.s32 %s13, 2
      %s26 = sadd.s32 1, %s21
      %p27 = scmp.ge.s32.totalorder %s26, 1
      %s28 = scalar_select %p27, 0, %s26
      %s29 = sadd.s32 1, %s20
      %s30 = scalar_select %p27, %s29, %s20
      %p31 = scmp.ge.s32.totalorder %s30, 2
      %s32 = scalar_select %p31, 0, %s30
      %s33 = ssub.s32 %s20, %s32
      %s34 = ssub.s32 %s21, %s28
      %s35 = sor.u32 %s33, %s34
      %p36 = scmp.eq.s32.totalorder %s35, 0
      %s38 = sadd.s32 %s37, 1
      %s39 = scalar_select %p36, %s37, %s38
      %p42 = pneg %p36
      %p43 = scmp.eq.s32.totalorder %s13, 1
      %p44 = por %p42, %p43
      %p45 = scmp.ne.s32.totalorder %s37, %s40
      %p46 = scmp.eq.s32.totalorder %s13, 0
      %p47 = por %p45, %p46
      %p48 = scmp.ne.s32.totalorder %s37, %s40
      %p49 = scmp.eq.s32.totalorder %s18, 1
      %p50 = por %p48, %p49
      %p51 = scmp.ne.s32.totalorder %s40, %s41
      %p52 = scmp.eq.s32.totalorder %s18, 0
      %p53 = por %p51, %p52
      %p54 = scmp.ne.s32.totalorder %s40, %s41
      %p55 = scmp.eq.s32.totalorder %s19, 1
      %p56 = por %p54, %p55
      %p58 = scmp.ne.s32.totalorder %s41, %s57
      %p59 = scmp.eq.s32.totalorder %s19, 0
      %p60 = por %p58, %p59
      %s61 = ssub.s32 %s20, %s32
      %s62 = ssub.s32 %s21, %s28
      %s63 = sor.u32 %s61, %s62
      %p64 = scmp.eq.s32.totalorder %s63, 0
      %s66 = sadd.s32 %s65, 1
      %s67 = scalar_select %p64, %s65, %s66
      %p70 = pneg %p64
      %p71 = scmp.eq.s32.totalorder %s13, 1
      %p72 = por %p70, %p71
      %p73 = scmp.ne.s32.totalorder %s65, %s68
      %p74 = scmp.eq.s32.totalorder %s13, 0
      %p75 = por %p73, %p74
      %p76 = scmp.ne.s32.totalorder %s65, %s68
      %p77 = scmp.eq.s32.totalorder %s18, 1
      %p78 = por %p76, %p77
      %p79 = scmp.ne.s32.totalorder %s68, %s69
      %p80 = scmp.eq.s32.totalorder %s18, 0
      %p81 = por %p79, %p80
      %p82 = scmp.ne.s32.totalorder %s68, %s69
      %p83 = scmp.eq.s32.totalorder %s19, 1
      %p84 = por %p82, %p83
      %p86 = scmp.ne.s32.totalorder %s69, %s85
      %p87 = scmp.eq.s32.totalorder %s19, 0
      %p88 = por %p86, %p87
      %p89 = scmp.le.s32.totalorder 1, %s13
      %p90 = scmp.lt.s32.totalorder %s13, 3
      %p91 = pnand %p89, %p90
      %p92 = pneg %p91
      // Predicated region
      $region9: #{tpu_custom_call.1} parent=5 // pred_check
        _
      $region10: #{tpu_custom_call.1} parent=5 // pred_check_branch
        %94 = sbr.rel (%p91) target = $region12
      $region11: #{tpu_custom_call.1} parent=5 // pred_region
        %s95 = ssub.s32 %s13, 1
      $region12: #{tpu_custom_call.1} parent=5 // pred_fallthru
        _
      %p96 = scmp.lt.s32.totalorder %s13, 2
      // Predicated region
      $region13: #{tpu_custom_call.1} parent=5 // pred_check
        %p97 = pneg %p96
      $region14: #{tpu_custom_call.1} parent=5 // pred_check_branch
        %99 = sbr.rel (%p97) target = $region16
      $region15: #{tpu_custom_call.1} parent=5 // pred_region
        // Predicated region
        $region17: #{tpu_custom_call.1} parent=15 // pred_check
          %p100 = pneg %p47
        $region18: #{tpu_custom_call.1} parent=15 // pred_check_branch
          %102 = sbr.rel (%p100) target = $region20
        $region19: #{tpu_custom_call.1} parent=15 // pred_region
          %s103 = sand.u32 %s37, 1
          %s104 = scalar_lea.sflag [#allocation3], %s103
          %s105 = sand.u32 %s37, 1
          %s106 = smul.addr %s105, 16
          %s107 = scalar_lea.vmem [#allocation2], %s106
          %s109 = ssub.s32 256, 256
          %110 = vsyncadd %s104, %s109
          %s111 = smul.addr %s20, 2
          %s112 = sadd.s32 %s21, %s111
          %s113 = smul.addr %s112, 128
          %s114 = scalar_lea.hbm %s0, %s113
          %s115 = sshll.u32 %s107, 4
          %s116 = int_to_ptr.vmem [resolvable:$true] %s115
          %121 = dma.hbm_to_vmem [thread:$0]  %s114, 256, %s116, %s104, 128, 128, 8
        $region20: #{tpu_custom_call.1} parent=15 // pred_fallthru
          _
      $region16: #{tpu_custom_call.1} parent=5 // pred_fallthru
        _
      %p122 = scmp.le.s32.totalorder 1, %s13
      %p123 = scmp.lt.s32.totalorder %s13, 3
      %p124 = pnand %p122, %p123
      %p125 = pneg %p124
      // Predicated region
      $region21: #{tpu_custom_call.1} parent=5 // pred_check
        _
      $region22: #{tpu_custom_call.1} parent=5 // pred_check_branch
        %127 = sbr.rel (%p124) target = $region24
      $region23: #{tpu_custom_call.1} parent=5 // pred_region
        %s128 = ssub.s32 %s13, 1
        %s129 = sand.u32 %s40, 1
        %s130 = scalar_lea.sflag [#allocation3], %s129
        %s131 = sand.u32 %s40, 1
        %s132 = smul.addr %s131, 16
        %s133 = scalar_lea.vmem [#allocation2], %s132
        // Predicated region
        $region25: #{tpu_custom_call.1} parent=23 // pred_check
          %p134 = pneg %p53
        $region26: #{tpu_custom_call.1} parent=23 // pred_check_branch
          %136 = sbr.rel (%p134) target = $region28
        $region27: #{tpu_custom_call.1} parent=23 // pred_region
          %137 = dma.done %s130, 256
        $region28: #{tpu_custom_call.1} parent=23 // pred_fallthru
          _
        %s138 = sand.u32 %s40, 1
        %s139 = scalar_lea.sflag [#allocation3], %s138
        %s140 = sand.u32 %s40, 1
        %s141 = smul.addr %s140, 16
        %s142 = scalar_lea.vmem [#allocation2], %s141
        %p143 = pneg %p53
        %p144 = pneg %p50
        %p145 = pneg %p81
        %p146 = pneg %p78
        %s147 = sand.u32 %s68, 1
        %s148 = scalar_lea.sflag [#allocation4], %s147
        %s149 = sand.u32 %s68, 1
        %s150 = smul.addr %s149, 16
        %s151 = scalar_lea.vmem [#allocation5], %s150
        %v152 = vld [vmem:[%s133] sm:$0xff]
        %v153 = vld [vmem:[%s133 + $0x8] sm:$0xff]
        %v154 = vadd.f32 %v152, %v153
        %v155 = vrot.slane %v154, 4
        %v156 = vadd.f32 %v154, %v155
        %v157 = vrot.slane %v156, 2
        %v158 = vadd.f32 %v156, %v157
        %v159 = vrot.slane %v158, 1
        %v160 = vadd.f32 %v158, %v159
        %v161 = vrcp.pop 16.0
        %v162 = vmul.f32 %v160, %v161
        %v163 = vsub.f32 %v152, %v162
        %v164 = vsub.f32 %v153, %v162
        %165 = vst [vmem:[%s151] sm:$0xff] %v163
        %166 = vst [vmem:[%s151 + $0x8] sm:$0xff] %v164
        %v167 = vld [vmem:[%s151] sm:$0xff]
        %v168 = vld [vmem:[%s151 + $0x8] sm:$0xff]
        %v169 = vmul.f32 %v167, %v167
        %v170 = vmul.f32 %v168, %v168
        %v171 = vadd.f32 %v169, %v170
        %v172 = vrot.slane %v171, 4
        %v173 = vadd.f32 %v171, %v172
        %v174 = vrot.slane %v173, 2
        %v175 = vadd.f32 %v173, %v174
        %v176 = vrot.slane %v175, 1
        %v177 = vadd.f32 %v175, %v176
        %v178 = vrcp.pop 15.0
        %v179 = vmul.f32 %v177, %v178
        %v180 = vrsqrt.pop %v179
        %v181 = vmul.f32 %v167, %v180
        %v182 = vmul.f32 %v168, %v180
        %183 = vst [vmem:[%s151] sm:$0xff] %v181
        %184 = vst [vmem:[%s151 + $0x8] sm:$0xff] %v182
        %s185 = sand.u32 %s68, 1
        %s186 = scalar_lea.sflag [#allocation4], %s185
        %s187 = sand.u32 %s68, 1
        %s188 = smul.addr %s187, 16
        %s189 = scalar_lea.vmem [#allocation5], %s188
        // Predicated region
        $region29: #{tpu_custom_call.1} parent=23 // pred_check
          %p190 = pneg %p78
        $region30: #{tpu_custom_call.1} parent=23 // pred_check_branch
          %192 = sbr.rel (%p190) target = $region32
        $region31: #{tpu_custom_call.1} parent=23 // pred_region
          %s194 = ssub.s32 256, 256
          %195 = vsyncadd %s186, %s194
          %s196 = smul.addr %s22, 2
          %s197 = sadd.s32 %s23, %s196
          %s198 = smul.addr %s197, 128
          %s199 = scalar_lea.hbm %s1, %s198
          %s200 = sshll.u32 %s189, 4
          %s201 = int_to_ptr.vmem [resolvable:$true] %s200
          %206 = dma.vmem_to_hbm [thread:$0]  %s201, 256, %s199, %s186, 128, 128, 8
        $region32: #{tpu_custom_call.1} parent=23 // pred_fallthru
          _
      $region24: #{tpu_custom_call.1} parent=5 // pred_fallthru
        _
      %p207 = scmp.le.s32.totalorder 2, %s13
      // Predicated region
      $region33: #{tpu_custom_call.1} parent=5 // pred_check
        %p208 = pneg %p207
      $region34: #{tpu_custom_call.1} parent=5 // pred_check_branch
        %210 = sbr.rel (%p208) target = $region36
      $region35: #{tpu_custom_call.1} parent=5 // pred_region
        %s211 = ssub.s32 %s13, 2
        // Predicated region
        $region37: #{tpu_custom_call.1} parent=35 // pred_check
          %p212 = pneg %p84
        $region38: #{tpu_custom_call.1} parent=35 // pred_check_branch
          %214 = sbr.rel (%p212) target = $region40
        $region39: #{tpu_custom_call.1} parent=35 // pred_region
          %s215 = sand.u32 %s69, 1
          %s216 = scalar_lea.sflag [#allocation4], %s215
          %s217 = sand.u32 %s69, 1
          %s218 = smul.addr %s217, 16
          %s219 = scalar_lea.vmem [#allocation5], %s218
          %220 = dma.done %s216, 256
        $region40: #{tpu_custom_call.1} parent=35 // pred_fallthru
          _
      $region36: #{tpu_custom_call.1} parent=5 // pred_fallthru
        _
    $region6: #{tpu_custom_call.1} parent=1 // loop_footer
      %s17 = sadd.s32 1, %s13
    $region7: #{tpu_custom_call.1} parent=1 // loop_footer_branch
      %12 = sbr.rel target = $region3
    $region8: #{tpu_custom_call.1} parent=1 // loop_exit
      _
    %221 = vsyncpa [#allocation3], 1
    %s222 = scalar_lea.sflag [#allocation3], 1
    %223 = vsyncpa %s222, 1
    %224 = vsyncpa [#allocation4], 1
    %s225 = scalar_lea.sflag [#allocation4], 1
    %226 = vsyncpa %s225, 1

</llo_original>
